<compile_context>
chip_gen: v5e
topology: v5e:2x2
jax: 0.10.0
libtpu: 0.0.40
codegen_flags: <defaults>
</compile_context>

<pallas_src>
import functools

import jax
import jax.numpy as jnp
from jax.experimental import pallas as pl
from jax.experimental.pallas import tpu as pltpu


ALPHA = 0.25
GAMMA = 2.0            # gamma == 2 is exploited below (squares, not pow)
LANE = 128             # lane-dense last dimension
MAX_BLOCK_ROWS = 4096  # 4096 x 128 x 4B = 2 MiB per f32 input block


def _focal_kernel(num_blocks, bpc, block_rows, acc_rows, rem_last, inv_count,
                  has_mask, apply_tail_mask, guard_phantom, *refs):
    if has_mask:
        p_ref, t_ref, m_ref, o_ref, acc_ref = refs
    else:
        p_ref, t_ref, o_ref, acc_ref = refs
        m_ref = None

    c = pl.program_id(0)            # core-split axis ("parallel")
    j = pl.program_id(1)            # reduction axis ("arbitrary")
    idx = c * bpc + j               # global block index
    is_real = idx < num_blocks
    is_last_real = idx == (num_blocks - 1)

    @pl.when(j == 0)
    def _init():
        acc_ref[...] = jnp.zeros_like(acc_ref)

    def focal(x, t, m):
        # Shared e = exp(-|x|) feeds a stable BCE-with-logits and a stable
        # sigmoid:  bce = max(x,0) - x*t + log1p(e),  sigmoid(|x|) = 1/(1+e).
        e = jnp.exp(-jnp.abs(x))
        bce = jnp.maximum(x, 0.0) - x * t + jnp.log1p(e)
        sig_abs = pl.reciprocal(1.0 + e, approx=True)     # EUP, not VALU
        prob = jnp.where(x >= 0.0, sig_abs, 1.0 - sig_abs)
        # gamma == 2.0 -> plain squares on the VPU (no float-exponent pow).
        loss = (t * (ALPHA * jnp.square(1.0 - prob))
                + (1.0 - t) * jnp.square(prob)) * bce
        if m is not None:
            loss = loss * m
        return loss

    def accumulate(loss):
        # Multi-chain vreg-shaped accumulation: (block_rows,128) folded into
        # (block_rows/acc_rows, acc_rows, 128) and reduced on the leading axis.
        acc_ref[...] += loss.reshape(-1, acc_rows, LANE).sum(axis=0)

    def plain_block():
        x = p_ref[...].astype(jnp.float32)
        t = t_ref[...].astype(jnp.float32)
        m = m_ref[...].astype(jnp.float32) if has_mask else None
        accumulate(focal(x, t, m))

    def tail_block():
        # Only the final real block pays for the iota/compare/select mask.
        lidx = (jax.lax.broadcasted_iota(jnp.int32, (block_rows, LANE), 0) * LANE
                + jax.lax.broadcasted_iota(jnp.int32, (block_rows, LANE), 1))
        valid = lidx < rem_last         # rem_last is a host-side Python int
        x = jnp.where(valid, p_ref[...].astype(jnp.float32), 0.0)
        t = jnp.where(valid, t_ref[...].astype(jnp.float32), 0.0)
        m = m_ref[...].astype(jnp.float32) if has_mask else None
        loss = jnp.where(valid, focal(x, t, m), 0.0)
        accumulate(loss)

    if apply_tail_mask:
        @pl.when(jnp.logical_and(is_real, jnp.logical_not(is_last_real)))
        def _plain():
            plain_block()

        @pl.when(is_last_real)
        def _tail():
            tail_block()
    elif guard_phantom:
        @pl.when(is_real)
        def _plain():
            plain_block()
    else:
        plain_block()

    @pl.when(j == pl.num_programs(1) - 1)
    def _finalize():
        # Per-core lane-dense partial sum, pre-divided by the ORIGINAL
        # element count (matches torch .mean()); wrapper sums ncores*128 f32.
        o_ref[...] = (acc_ref[...].sum(axis=0, keepdims=True)
                      * inv_count).reshape(1, 1, LANE)


def bce_focal_loss(preds, targets, mask=None, *, block_rows=None):
    """Pallas implementation of BCEFocalLoss.forward. Returns a scalar f32."""
    assert preds.shape == targets.shape
    assert GAMMA == 2.0  # kernel hard-codes gamma=2 via jnp.square
    n = int(preds.size)
    assert n > 0
    has_mask = mask is not None

    flat_p = preds.reshape(-1)
    flat_t = targets.reshape(-1)
    if has_mask:
        m_arr = jnp.asarray(mask)
        if m_arr.shape != preds.shape:
            # TODO(synk): stream lower-rank masks via a broadcasting BlockSpec
            # (stride-0 rows / SMEM scalars) instead of materializing in HBM.
            m_arr = jnp.broadcast_to(m_arr, preds.shape)
        flat_m = m_arr.reshape(-1)

    # Pad only to the next LANE multiple (<= 127 elements, zero when already
    # aligned).  Block-level raggedness is masked in-kernel, so there is no
    # up-to-a-block host-side pad / full-array copy.
    lane_pad = (-n) % LANE
    if lane_pad:
        flat_p = jnp.pad(flat_p, (0, lane_pad))
        flat_t = jnp.pad(flat_t, (0, lane_pad))
        if has_mask:
            flat_m = jnp.pad(flat_m, (0, lane_pad))
    rows = (n + lane_pad) // LANE

    # Block size: full array when it fits a single block (block == full dims
    # is legal for any dtype/sublane packing), else 2 MiB blocks (4096 rows,
    # a multiple of the 8/16/32-row sublane tile of every dtype).
    if block_rows is None:
        block_rows = rows if rows <= MAX_BLOCK_ROWS else MAX_BLOCK_ROWS
    block_rows = min(block_rows, rows)

    num_blocks = pl.cdiv(rows, block_rows)
    # Unconditional 2-TensorCore split whenever there is more than one block
    # (no-op on single-TC v5e/v6e); odd block counts get one phantom slot.
    ncores = 1 if num_blocks == 1 else 2
    bpc = pl.cdiv(num_blocks, ncores)
    guard_phantom = ncores * bpc > num_blocks

    # Valid elements in the final real block (Python int -> no i32 overflow).
    rem_last = n - (num_blocks - 1) * block_rows * LANE
    apply_tail_mask = rem_last != block_rows * LANE

    # Multi-chain accumulator width (up to 32 rows) for VPU-add ILP.
    acc_rows = next(r for r in (32, 16, 8, 4, 2, 1) if block_rows % r == 0)

    inputs = [flat_p.reshape(rows, LANE), flat_t.reshape(rows, LANE)]
    if has_mask:
        inputs.append(flat_m.reshape(rows, LANE))

    last_block = num_blocks - 1
    in_spec = pl.BlockSpec(
        (block_rows, LANE),
        lambda c, j: (jnp.minimum(c * bpc + j, last_block), 0))
    out_spec = pl.BlockSpec((1, 1, LANE), lambda c, j: (c, 0, 0))

    kernel = functools.partial(
        _focal_kernel, num_blocks, bpc, block_rows, acc_rows, rem_last,
        1.0 / n, has_mask, apply_tail_mask, guard_phantom)

    out = pl.pallas_call(
        kernel,
        out_shape=jax.ShapeDtypeStruct((ncores, 1, LANE), jnp.float32),
        grid_spec=pltpu.PrefetchScalarGridSpec(
            num_scalar_prefetch=0,
            grid=(ncores, bpc),
            in_specs=[in_spec] * len(inputs),
            out_specs=out_spec,
            scratch_shapes=[pltpu.VMEM((acc_rows, LANE), jnp.float32)],
        ),
        compiler_params=pltpu.CompilerParams(
            dimension_semantics=("parallel", "arbitrary")),
    )(*inputs)

    # Tiny final reduce: (ncores, 1, 128) lane-dense, pre-divided partials.
    return jnp.sum(out)


def _reference(preds, targets, mask=None, alpha=ALPHA, gamma=GAMMA):
    """Pure-JAX reference mirroring the PyTorch module."""
    x = preds.astype(jnp.float32)
    t = targets.astype(jnp.float32)
    bce = jnp.maximum(x, 0.0) - x * t + jnp.log1p(jnp.exp(-jnp.abs(x)))
    p = jax.nn.sigmoid(x)
    loss = t * alpha * (1.0 - p) ** gamma * bce + (1.0 - t) * p ** gamma * bce
    if mask is not None:
        loss = loss * jnp.broadcast_to(jnp.asarray(mask), x.shape)
    return loss.mean()


if __name__ == "__main__":
    key = jax.random.PRNGKey(0)
    k1, k2, k3, k4, k5 = jax.random.split(key, 5)

    # Tolerance accounts for the in-kernel approximate EUP reciprocal
    # (pl.reciprocal(approx=True)); structural errors would be >>1%.
    tol = dict(rtol=5e-3, atol=5e-4)

    # Primary case: small NCHW logits/targets, as the loss is typically used.
    shape = (2, 4, 16, 16)
    preds = jax.random.normal(k1, shape, dtype=jnp.float32) * 2.0
    targets = (jax.random.uniform(k2, shape) > 0.5).astype(jnp.float32)
    mask = (jax.random.uniform(k3, shape) > 0.3).astype(jnp.float32)

    out = jax.block_until_ready(bce_focal_loss(preds, targets))
    assert jnp.allclose(out, _reference(preds, targets), **tol), out

    out_m = jax.block_until_ready(bce_focal_loss(preds, targets, mask))
    assert jnp.allclose(out_m, _reference(preds, targets, mask), **tol), out_m

    # Ragged size (n % 128 != 0), tiled with a small override block:
    # exercises the lane pad, the partial final block, the in-kernel tail
    # mask, the 2-core split and the phantom-block guard.
    shape2 = (2, 3, 17, 23)
    p2 = jax.random.normal(k4, shape2, dtype=jnp.float32) * 2.0
    t2 = (jax.random.uniform(k5, shape2) > 0.5).astype(jnp.float32)
    out2 = jax.block_until_ready(bce_focal_loss(p2, t2, block_rows=8))
    assert jnp.allclose(out2, _reference(p2, t2), **tol), out2

    # Block-aligned but odd block count (phantom slot, no tail mask), masked.
    shape3 = (2, 4, 24, 16)
    p3 = jax.random.normal(k1, shape3, dtype=jnp.float32)
    t3 = (jax.random.uniform(k2, shape3) > 0.5).astype(jnp.float32)
    m3 = (jax.random.uniform(k3, shape3) > 0.3).astype(jnp.float32)
    out3 = jax.block_until_ready(bce_focal_loss(p3, t3, m3, block_rows=8))
    assert jnp.allclose(out3, _reference(p3, t3, m3), **tol), out3

    print("KERNEL_OK")
</pallas_src>

<mosaic_0001>
module attributes {stable_mosaic.version = 11 : i64} {
  func.func @_focal_kernel(%arg0: i32, %arg1: i32, %arg2: memref<16x128xf32, #tpu.memory_space<vmem>>, %arg3: memref<16x128xf32, #tpu.memory_space<vmem>>, %arg4: memref<1x1x128xf32, #tpu.memory_space<vmem>>, %arg5: memref<16x128xf32, #tpu.memory_space<vmem>>) attributes {dimension_semantics = [#tpu.dimension_semantics<parallel>, #tpu.dimension_semantics<arbitrary>], iteration_bounds = array<i64: 1, 1>, scalar_prefetch = 0 : i64, scratch_operands = 1 : i64, tpu.core_type = #tpu.core_type<tc>, window_params = [{transform_indices = @transform_0, window_bounds = array<i64: 16, 128>}, {transform_indices = @transform_1, window_bounds = array<i64: 16, 128>}, {transform_indices = @transform_2, window_bounds = array<i64: 1, 1, 128>}]} {
    %c0_i32 = arith.constant 0 : i32
    %0 = arith.cmpi eq, %arg1, %c0_i32 : i32
    %1 = arith.extui %0 : i1 to i32
    %c0_i32_0 = arith.constant 0 : i32
    %2 = arith.cmpi ne, %1, %c0_i32_0 : i32
    scf.if %2 {
      %cst_18 = arith.constant 0.000000e+00 : f32
      %43 = vector.broadcast %cst_18 : f32 to vector<16x128xf32>
      %c0_19 = arith.constant 0 : index
      %c0_20 = arith.constant 0 : index
      %44 = vector.load %arg5[%c0_19, %c0_20] : memref<16x128xf32, #tpu.memory_space<vmem>>, vector<16x128xf32>
      tpu.vector_store %arg5[%c0_19, %c0_20], %43 {strides = array<i32>} : memref<16x128xf32, #tpu.memory_space<vmem>>, vector<16x128xf32>,
    } else {
    }
    %c0 = arith.constant 0 : index
    %c0_1 = arith.constant 0 : index
    %3 = vector.load %arg2[%c0, %c0_1] : memref<16x128xf32, #tpu.memory_space<vmem>>, vector<16x128xf32>
    %c0_2 = arith.constant 0 : index
    %c0_3 = arith.constant 0 : index
    %4 = vector.load %arg3[%c0_2, %c0_3] : memref<16x128xf32, #tpu.memory_space<vmem>>, vector<16x128xf32>
    %5 = math.absf %3 : vector<16x128xf32>
    %cst = arith.constant 0.000000e+00 : f32
    %6 = vector.broadcast %cst : f32 to vector<16x128xf32>
    %7 = arith.subf %6, %5 : vector<16x128xf32>
    %8 = math.exp %7 : vector<16x128xf32>
    %cst_4 = arith.constant 0.000000e+00 : f32
    %9 = vector.broadcast %cst_4 : f32 to vector<16x128xf32>
    %10 = arith.maximumf %3, %9 : vector<16x128xf32>
    %11 = arith.mulf %3, %4 : vector<16x128xf32>
    %12 = arith.subf %10, %11 : vector<16x128xf32>
    %13 = math.log1p %8 : vector<16x128xf32>
    %14 = arith.addf %12, %13 : vector<16x128xf32>
    %cst_5 = arith.constant 1.000000e+00 : f32
    %15 = vector.broadcast %cst_5 : f32 to vector<16x128xf32>
    %16 = arith.addf %15, %8 : vector<16x128xf32>
    %17 = tpu.reciprocal %16 {approx = true} : vector<16x128xf32> -> vector<16x128xf32>
    %cst_6 = arith.constant 0.000000e+00 : f32
    %18 = vector.broadcast %cst_6 : f32 to vector<16x128xf32>
    %19 = arith.cmpf oge, %3, %18 : vector<16x128xf32>
    %cst_7 = arith.constant 1.000000e+00 : f32
    %20 = vector.broadcast %cst_7 : f32 to vector<16x128xf32>
    %21 = arith.subf %20, %17 : vector<16x128xf32>
    %22 = arith.select %19, %17, %21 : vector<16x128xi1>, vector<16x128xf32>
    %cst_8 = arith.constant 1.000000e+00 : f32
    %23 = vector.broadcast %cst_8 : f32 to vector<16x128xf32>
    %24 = arith.subf %23, %22 : vector<16x128xf32>
    %25 = arith.mulf %24, %24 : vector<16x128xf32>
    %cst_9 = arith.constant 2.500000e-01 : f32
    %26 = vector.broadcast %cst_9 : f32 to vector<16x128xf32>
    %27 = arith.mulf %26, %25 : vector<16x128xf32>
    %28 = arith.mulf %4, %27 : vector<16x128xf32>
    %cst_10 = arith.constant 1.000000e+00 : f32
    %29 = vector.broadcast %cst_10 : f32 to vector<16x128xf32>
    %30 = arith.subf %29, %4 : vector<16x128xf32>
    %31 = arith.mulf %22, %22 : vector<16x128xf32>
    %32 = arith.mulf %30, %31 : vector<16x128xf32>
    %33 = arith.addf %28, %32 : vector<16x128xf32>
    %34 = arith.mulf %33, %14 : vector<16x128xf32>
    %c0_11 = arith.constant 0 : index
    %c0_12 = arith.constant 0 : index
    %35 = vector.load %arg5[%c0_11, %c0_12] : memref<16x128xf32, #tpu.memory_space<vmem>>, vector<16x128xf32>
    %36 = vector.shape_cast %34 : vector<16x128xf32> to vector<1x16x128xf32>
    %cst_13 = arith.constant dense<0.000000e+00> : vector<16x128xf32>
    %37 = vector.multi_reduction <add>, %36, %cst_13 [0] : vector<1x16x128xf32> to vector<16x128xf32>
    %38 = arith.addf %35, %37 : vector<16x128xf32>
    %c0_14 = arith.constant 0 : index
    %c0_15 = arith.constant 0 : index
    %39 = vector.load %arg5[%c0_14, %c0_15] : memref<16x128xf32, #tpu.memory_space<vmem>>, vector<16x128xf32>
    tpu.vector_store %arg5[%c0_14, %c0_15], %38 {strides = array<i32>} : memref<16x128xf32, #tpu.memory_space<vmem>>, vector<16x128xf32>,
    %c0_i32_16 = arith.constant 0 : i32
    %40 = arith.cmpi eq, %arg1, %c0_i32_16 : i32
    %41 = arith.extui %40 : i1 to i32
    %c0_i32_17 = arith.constant 0 : i32
    %42 = arith.cmpi ne, %41, %c0_i32_17 : i32
    scf.if %42 {
      %c0_18 = arith.constant 0 : index
      %c0_19 = arith.constant 0 : index
      %43 = vector.load %arg5[%c0_18, %c0_19] : memref<16x128xf32, #tpu.memory_space<vmem>>, vector<16x128xf32>
      %cst_20 = arith.constant dense<0.000000e+00> : vector<128xf32>
      %44 = vector.multi_reduction <add>, %43, %cst_20 [0] : vector<16x128xf32> to vector<128xf32>
      %45 = vector.shape_cast %44 : vector<128xf32> to vector<1x128xf32>
      %cst_21 = arith.constant 4.8828125E-4 : f32
      %46 = vector.broadcast %cst_21 : f32 to vector<1x128xf32>
      %47 = arith.mulf %45, %46 : vector<1x128xf32>
      %48 = vector.shape_cast %47 : vector<1x128xf32> to vector<1x1x128xf32>
      %c0_22 = arith.constant 0 : index
      %c0_23 = arith.constant 0 : index
      %c0_24 = arith.constant 0 : index
      %49 = vector.load %arg4[%c0_22, %c0_23, %c0_24] : memref<1x1x128xf32, #tpu.memory_space<vmem>>, vector<1x1x128xf32>
      tpu.vector_store %arg4[%c0_22, %c0_23, %c0_24], %48 {strides = array<i32>} : memref<1x1x128xf32, #tpu.memory_space<vmem>>, vector<1x1x128xf32>,
    } else {
    }
    return
  }
  func.func @transform_0(%arg0: i32, %arg1: i32) -> (i32, i32) {
    %c1_i32 = arith.constant 1 : i32
    %0 = arith.muli %arg0, %c1_i32 : i32
    %1 = arith.addi %0, %arg1 : i32
    %c0_i32 = arith.constant 0 : i32
    %2 = arith.minsi %1, %c0_i32 : i32
    %c0_i32_0 = arith.constant 0 : i32
    %c0_i32_1 = arith.constant 0 : i32
    return %2, %c0_i32_0 : i32, i32
  }
  func.func @transform_1(%arg0: i32, %arg1: i32) -> (i32, i32) {
    %c1_i32 = arith.constant 1 : i32
    %0 = arith.muli %arg0, %c1_i32 : i32
    %1 = arith.addi %0, %arg1 : i32
    %c0_i32 = arith.constant 0 : i32
    %2 = arith.minsi %1, %c0_i32 : i32
    %c0_i32_0 = arith.constant 0 : i32
    %c0_i32_1 = arith.constant 0 : i32
    return %2, %c0_i32_0 : i32, i32
  }
  func.func @transform_2(%arg0: i32, %arg1: i32) -> (i32, i32, i32) {
    %c0_i32 = arith.constant 0 : i32
    %c0_i32_0 = arith.constant 0 : i32
    %c0_i32_1 = arith.constant 0 : i32
    return %arg0, %c0_i32, %c0_i32_0 : i32, i32, i32
  }
}

</mosaic_0001>

<llo_original>
// kernel: tpu_custom_call.1
$region0: #{tpu_custom_call.1}
  #allocation0 [shape = 'u32[]', space=smem, size = 0x4, offset = 0x4, fixed_abs, tag = 'smem constant byte address 0x4 - core index']
  #allocation1 [shape = 'u32[72,128]{1,0:T(1,128)}', space=vmem, size = 0x9000, scoped, tag = 'internal scratch']
  #allocation2 [shape = 'f32[16,128]{1,0:T(8,128)}', space=vmem, size = 0x2000, scoped, tag = 'scratch operand']
  %s0 = inlined_call_operand.hbm [shape: f32[16,128], index: 0, kind: input, shape index: {}]
  %s1 = inlined_call_operand.hbm [shape: f32[16,128], index: 1, kind: input, shape index: {}]
  %s2 = inlined_call_operand.hbm [shape: f32[1,1,128], index: 2, kind: output, shape index: {}]
  %s3 = sld [smem:[#allocation0]]
  $region34: #{tpu_custom_call.1} parent=0
    _
  %s5 = ssub.s32 1, %s3
  %s6 = scalar_select 0, %s5, %s3
  $region1: #{tpu_custom_call.1} parent=0
    #allocation3 [shape = 'u8[8192]{0}', space=vmem, size = 0x2000, scoped, tag = 'input window, operand 0, single buffered']
    #allocation4 [shape = 's32[1]{0}', space=sflag, size = 0x4, scoped, tag = 'scoped memory for tpu_custom_call.1']
    #allocation5 [shape = 's32[1]{0}', space=sflag, size = 0x4, scoped, tag = 'scoped memory for tpu_custom_call.1']
    #allocation6 [shape = 'u8[8192]{0}', space=vmem, size = 0x2000, scoped, tag = 'input window, operand 1, single buffered']
    #allocation7 [shape = 's32[1]{0}', space=sflag, size = 0x4, scoped, tag = 'scoped memory for tpu_custom_call.1']
    #allocation8 [shape = 'u8[512]{0}', space=vmem, size = 0x400, scoped, tag = 'output window, operand 0, single buffered']
    %7 = vsyncpa [#allocation4], 0
    %8 = vsyncpa [#allocation7], 0
    %9 = vsyncpa [#allocation5], 0
    // Predicated region
    $region2: #{tpu_custom_call.1} parent=1 // pred_check
      _
    $region3: #{tpu_custom_call.1} parent=1 // pred_check_branch
      %11 = sbr.rel (0) target = $region5
    $region4: #{tpu_custom_call.1} parent=1 // pred_region
      %s12 = sadd.s32 0, 0
      %p13 = scmp.lt.s32.totalorder %s12, 0
      %s14 = scalar_select %p13, %s12, 0
      %s15 = smul.u32 2, %s14
      %17 = vsyncadd [#allocation4], 0
      %s18 = smul.addr %s15, 8
      %s19 = scalar_lea.hbm %s0, %s18
      %s20 = sshll.u32 %s19, 4
      %s21 = int_to_ptr.hbm [resolvable:$true] %s20
      %s22 = sshll.u32 [#allocation3], 4
      %s23 = int_to_ptr.vmem [resolvable:$true] %s22
      %28 = dma.hbm_to_vmem [thread:$0]  %s21, 256, %s23, [#allocation4], 128, 128, 8
    $region5: #{tpu_custom_call.1} parent=1 // pred_fallthru
      _
    // Predicated region
    $region6: #{tpu_custom_call.1} parent=1 // pred_check
      _
    $region7: #{tpu_custom_call.1} parent=1 // pred_check_branch
      %30 = sbr.rel (0) target = $region9
    $region8: #{tpu_custom_call.1} parent=1 // pred_region
      %s31 = sadd.s32 0, 0
      %p32 = scmp.lt.s32.totalorder %s31, 0
      %s33 = scalar_select %p32, %s31, 0
      %s34 = smul.u32 2, %s33
      %36 = vsyncadd [#allocation7], 0
      %s37 = smul.addr %s34, 8
      %s38 = scalar_lea.hbm %s1, %s37
      %s39 = sshll.u32 %s38, 4
      %s40 = int_to_ptr.hbm [resolvable:$true] %s39
      %s41 = sshll.u32 [#allocation6], 4
      %s42 = int_to_ptr.vmem [resolvable:$true] %s41
      %47 = dma.hbm_to_vmem [thread:$0]  %s40, 256, %s42, [#allocation7], 128, 128, 8
    $region9: #{tpu_custom_call.1} parent=1 // pred_fallthru
      _
    // Predicated region
    $region10: #{tpu_custom_call.1} parent=1 // pred_check
      _
    $region11: #{tpu_custom_call.1} parent=1 // pred_check_branch
      %49 = sbr.rel (0) target = $region13
    $region12: #{tpu_custom_call.1} parent=1 // pred_region
      %51 = dma.done [#allocation4], 256
    $region13: #{tpu_custom_call.1} parent=1 // pred_fallthru
      _
    // Predicated region
    $region14: #{tpu_custom_call.1} parent=1 // pred_check
      _
    $region15: #{tpu_custom_call.1} parent=1 // pred_check_branch
      %53 = sbr.rel (0) target = $region17
    $region16: #{tpu_custom_call.1} parent=1 // pred_region
      %55 = dma.done [#allocation7], 256
    $region17: #{tpu_custom_call.1} parent=1 // pred_fallthru
      _
    %s56 = sadd.s32 0, 0
    %p57 = scmp.lt.s32.totalorder %s56, 0
    %s58 = scalar_select %p57, %s56, 0
    %s59 = smul.u32 2, %s58
    %s60 = sadd.s32 0, 0
    %p61 = scmp.lt.s32.totalorder %s60, 0
    %s62 = scalar_select %p61, %s60, 0
    %s63 = smul.u32 2, %s62
    %p64 = scmp.eq.s32.totalorder 0, 0
    // Predicated region
    $region18: #{tpu_custom_call.1} parent=1 // pred_check
      %p65 = pneg %p64
    $region19: #{tpu_custom_call.1} parent=1 // pred_check_branch
      %67 = sbr.rel (%p65) target = $region21
    $region20: #{tpu_custom_call.1} parent=1 // pred_region
      %68 = vst [vmem:[#allocation2] sm:$0xff] 0.0
      %69 = vst [vmem:[#allocation2 + $0x8] sm:$0xff] 0.0
    $region21: #{tpu_custom_call.1} parent=1 // pred_fallthru
      _
    %v70 = vld [vmem:[#allocation3] sm:$0xff]
    %v71 = vld [vmem:[#allocation3 + $0x8] sm:$0xff]
    %v72 = vld [vmem:[#allocation6] sm:$0xff]
    %v73 = vld [vmem:[#allocation6 + $0x8] sm:$0xff]
    %v74 = vand.u32 2147483647, %v70
    %v75 = vand.u32 2147483647, %v71
    %v76 = vsub.f32 0.0, %v74
    %v77 = vsub.f32 0.0, %v75
    %v78 = vmul.f32 %v76, 1.442695
    %v79 = vpow.pop %v78
    %v80 = vmul.f32 %v77, 1.442695
    %v81 = vpow.pop %v80
    %v82 = vmax.f32 %v70, 0.0
    %v83 = vmax.f32 %v71, 0.0
    %v84 = vmul.f32 %v70, %v72
    %v85 = vmul.f32 %v71, %v73
    %v86 = vsub.f32 %v82, %v84
    %v87 = vsub.f32 %v83, %v85
    %v88 = vadd.f32 %v79, 1.0
    %v89 = vlog2.pop %v88
    %v90 = vmul.f32 %v89, 0.6931472
    %v91 = vmul.f32 -0.5, %v79
    %v92 = vadd.f32 %v91, 1.0
    %v93 = vmul.f32 %v92, %v79
    %v94 = vand.u32 2147483647, %v79
    %vm95 = vcmp.lt.f32.partialorder %v94, 0.0004427343
    %v96 = vsel %vm95, %v93, %v90
    %v97 = vadd.f32 %v81, 1.0
    %v98 = vlog2.pop %v97
    %v99 = vmul.f32 %v98, 0.6931472
    %v100 = vmul.f32 -0.5, %v81
    %v101 = vadd.f32 %v100, 1.0
    %v102 = vmul.f32 %v101, %v81
    %v103 = vand.u32 2147483647, %v81
    %vm104 = vcmp.lt.f32.partialorder %v103, 0.0004427343
    %v105 = vsel %vm104, %v102, %v99
    %v106 = vadd.f32 %v86, %v96
    %v107 = vadd.f32 %v87, %v105
    %v108 = vadd.f32 %v79, 1.0
    %v109 = vadd.f32 %v81, 1.0
    %v110 = vrcp.pop %v108
    %v111 = vrcp.pop %v109
    %vm112 = vcmp.ge.f32.partialorder %v70, 0.0
    %vm113 = vcmp.ge.f32.partialorder %v71, 0.0
    %v114 = vsub.f32 1.0, %v110
    %v115 = vsub.f32 1.0, %v111
    %v116 = vsel %vm112, %v110, %v114
    %v117 = vsel %vm113, %v111, %v115
    %v118 = vsub.f32 1.0, %v116
    %v119 = vsub.f32 1.0, %v117
    %v120 = vmul.f32 %v118, %v118
    %v121 = vmul.f32 %v119, %v119
    %v122 = vmul.f32 %v120, 0.25
    %v123 = vmul.f32 %v121, 0.25
    %v124 = vmul.f32 %v72, %v122
    %v125 = vmul.f32 %v73, %v123
    %v126 = vsub.f32 1.0, %v72
    %v127 = vsub.f32 1.0, %v73
    %v128 = vmul.f32 %v116, %v116
    %v129 = vmul.f32 %v117, %v117
    %v130 = vmul.f32 %v126, %v128
    %v131 = vmul.f32 %v127, %v129
    %v132 = vadd.f32 %v124, %v130
    %v133 = vadd.f32 %v125, %v131
    %v134 = vmul.f32 %v132, %v106
    %v135 = vmul.f32 %v133, %v107
    %v136 = vld [vmem:[#allocation2] sm:$0xff]
    %v137 = vld [vmem:[#allocation2 + $0x8] sm:$0xff]
    %v138 = vadd.f32 %v134, 0.0
    %v139 = vadd.f32 %v135, 0.0
    %v140 = vadd.f32 %v136, %v138
    %v141 = vadd.f32 %v137, %v139
    %142 = vst [vmem:[#allocation2] sm:$0xff] %v140
    %143 = vst [vmem:[#allocation2 + $0x8] sm:$0xff] %v141
    // Predicated region
    $region22: #{tpu_custom_call.1} parent=1 // pred_check
      %p144 = pneg %p64
    $region23: #{tpu_custom_call.1} parent=1 // pred_check_branch
      %146 = sbr.rel (%p144) target = $region25
    $region24: #{tpu_custom_call.1} parent=1 // pred_region
      %v147 = vld [vmem:[#allocation2] sm:$0xff]
      %v148 = vld [vmem:[#allocation2 + $0x8] sm:$0xff]
      %v149 = vadd.f32 %v147, %v148
      %v150 = vrot.slane %v149, 4
      %v151 = vadd.f32 %v149, %v150
      %v152 = vrot.slane %v151, 2
      %v153 = vadd.f32 %v151, %v152
      %v154 = vrot.slane %v153, 1
      %v155 = vadd.f32 %v153, %v154
      %v156 = vmul.f32 %v155, 0.00048828125
      %157 = vst [vmem:[#allocation8] sm:$0x1] %v156
    $region25: #{tpu_custom_call.1} parent=1 // pred_fallthru
      _
    // Predicated region
    $region26: #{tpu_custom_call.1} parent=1 // pred_check
      _
    $region27: #{tpu_custom_call.1} parent=1 // pred_check_branch
      %159 = sbr.rel (0) target = $region29
    $region28: #{tpu_custom_call.1} parent=1 // pred_region
      %161 = vsyncadd [#allocation5], 0
      %s163 = sshll.u32 [#allocation8], 4
      %s164 = int_to_ptr.vmem [resolvable:$true] %s163
      %s165 = sshll.u32 %s2, 4
      %s166 = int_to_ptr.hbm [resolvable:$true] %s165
      %168 = dma.vmem_to_hbm [thread:$0]  %s164, 16, %s166, [#allocation5]
    $region29: #{tpu_custom_call.1} parent=1 // pred_fallthru
      _
    // Predicated region
    $region30: #{tpu_custom_call.1} parent=1 // pred_check
      _
    $region31: #{tpu_custom_call.1} parent=1 // pred_check_branch
      %170 = sbr.rel (0) target = $region33
    $region32: #{tpu_custom_call.1} parent=1 // pred_region
      %172 = dma.done [#allocation5], 16
    $region33: #{tpu_custom_call.1} parent=1 // pred_fallthru
      _
    %173 = vsyncpa [#allocation4], 1
    %174 = vsyncpa [#allocation7], 1
    %175 = vsyncpa [#allocation5], 1

</llo_original>
